<compile_context>
chip_gen: v5e
topology: v5e:2x2
jax: 0.10.0
libtpu: 0.0.40
codegen_flags: <defaults>
</compile_context>

<pallas_src>
from functools import partial

import numpy as np
import jax
import jax.numpy as jnp
from jax.experimental import pallas as pl
from jax.experimental.pallas import tpu as pltpu

# ----- module-level hyperparameters (globals in the original file) -----------
k = 4                # conv kernel size == spatial size of the input feature map
ni = 12              # used only for conv_channels rounding
weight_stagger = 2   # used only for conv_channels rounding

N_PAD = 128          # lane-dense output width (n_classes zero-padded up to 128)


# ----------------------------- Pallas kernel ----------------------------------
def _fused_kernel(x_ref, wd_ref, wc_ref, out_ref, flag_ref):
    # dense path:  out = x @ W_dense.T            (B, K) @ (K, 128) -> (B, 128)
    out = jnp.dot(x_ref[...], wd_ref[...], preferred_element_type=jnp.float32)
    out_ref[...] = out

    # conv path: kernel_size == spatial size -> 1x1 conv output == contraction over
    # C*k*k on batch row 0 (zero-padded channels dropped, they contribute 0):
    y = jnp.dot(x_ref[0:1, :], wc_ref[...], preferred_element_type=jnp.float32)

    # in-kernel replacement for `assert torch.equal(y.squeeze(), out.squeeze())`:
    # number of mismatching lanes (0 == paths agree). No host sync in forward().
    flag_ref[...] = jnp.sum((y != out[0:1, :]).astype(jnp.int32),
                            axis=-1, keepdims=True)


def _fused_pallas(x, wd_t_pad, wc_t_pad):
    B = x.shape[0]
    return pl.pallas_call(
        _fused_kernel,
        out_shape=(
            jax.ShapeDtypeStruct((B, N_PAD), jnp.float32),  # padded dense output
            jax.ShapeDtypeStruct((1, 1), jnp.int32),        # mismatch counter
        ),
        in_specs=[pl.BlockSpec(memory_space=pltpu.MemorySpace.VMEM)] * 3,
        out_specs=(
            pl.BlockSpec(memory_space=pltpu.MemorySpace.VMEM),
            pl.BlockSpec(memory_space=pltpu.MemorySpace.VMEM),
        ),
    )(x, wd_t_pad, wc_t_pad)


@partial(jax.jit, static_argnames=("n_classes",))
def _forward_impl(x, wd_t_pad, wc_t_pad, n_classes):
    out_pad, mism = _fused_pallas(x, wd_t_pad, wc_t_pad)
    return out_pad[:, :n_classes], mism[0, 0]


# ------------------------------ module port ------------------------------------
class DensetoConvPallas:
    def __init__(self, input_shape, n_classes, key):
        self.n_classes = n_classes
        self.input_shape = input_shape
        self.n_inputs = int(np.prod(list(input_shape[1:])))
        self.conv_channels = int(
            np.ceil(self.n_inputs // k ** 2 / (ni // weight_stagger)) * ni // weight_stagger
        )

        # dense.weight <- randint in {-1, 0, 1}; dense.bias is all zeros (dropped).
        self.dense_w = jax.random.randint(
            key, (n_classes, self.n_inputs), minval=-1, maxval=2
        ).astype(jnp.float32)

        # conv.weight <- weights_to_conv(dense.weight)  (kept for faithfulness)
        self.conv_w = self.weights_to_conv(self.dense_w)   # (n_classes, conv_channels, k, k)

        # ---- hoisted layout plumbing (done ONCE, not per forward call) ----
        C = self.input_shape[1]
        K = self.n_inputs
        # dense weight, transposed and lane-padded to 128: (K, 128)
        wd = jnp.zeros((K, N_PAD), jnp.float32).at[:, :n_classes].set(self.dense_w.T)
        # conv weight: drop zero-padded channels, flatten row-major (C,k,k) -> C*k*k,
        # transpose, lane-pad to 128: (K, 128)
        wc_flat = self.conv_w[:, :C].reshape(n_classes, C * k * k)
        wc = jnp.zeros((K, N_PAD), jnp.float32).at[:, :n_classes].set(wc_flat.T)
        self._wd_t_pad = wd
        self._wc_t_pad = wc

        self.last_mismatch_count = None   # device scalar after each forward()

    def weights_to_conv(self, weights):
        # index mapping  i -> (c = i // (H*W), y = (i % (H*W)) // k, x = (i % (H*W)) % k)
        # with H == W == k is exactly a row-major reshape; extra channels are zero.
        C = self.input_shape[1]
        w4 = weights.reshape(self.n_classes, C, k, k)
        pad_c = self.conv_channels - C
        if pad_c > 0:
            w4 = jnp.concatenate(
                [w4, jnp.zeros((self.n_classes, pad_c, k, k), jnp.float32)], axis=1
            )
        return w4

    def forward(self, x):
        # Single fused Pallas kernel: dense path + conv path + in-kernel equality check.
        out, mism = _forward_impl(x, self._wd_t_pad, self._wc_t_pad, self.n_classes)
        # No host sync here (mirrors the reference assert without blocking the pipeline);
        # the mismatch counter is checked asynchronously / at test time.
        self.last_mismatch_count = mism
        return out


# --------------------------------- main -----------------------------------------
if __name__ == "__main__":
    # input_shape (N, C, H, W) with H == W == k (required by the original index mapping)
    input_shape = (1, 4, k, k)          # n_inputs = 4*4*4 = 64, conv_channels = 6
    n_classes = 10

    key = jax.random.PRNGKey(0)
    k_w, k_x = jax.random.split(key)

    model = DensetoConvPallas(input_shape, n_classes, k_w)

    # integer-valued float inputs so the exact equality check between the two paths
    # holds bit-for-bit, mirroring torch.equal in the reference.
    x = jax.random.randint(k_x, (1, model.n_inputs), minval=-2, maxval=3).astype(jnp.float32)

    out = model.forward(x)
    jax.block_until_ready(out)
    assert out.shape == (1, n_classes)
    # one-time (test-only) check of the in-kernel conv==dense equality flag
    assert int(model.last_mismatch_count) == 0, "conv path and dense path disagree"
    print("KERNEL_OK")
</pallas_src>

<mosaic_0001>
module attributes {stable_mosaic.version = 11 : i64} {
  func.func @_fused_kernel(%arg0: memref<1x64xf32, #tpu.memory_space<vmem>>, %arg1: memref<64x128xf32, #tpu.memory_space<vmem>>, %arg2: memref<64x128xf32, #tpu.memory_space<vmem>>, %arg3: memref<1x128xf32, #tpu.memory_space<vmem>>, %arg4: memref<1x1xi32, #tpu.memory_space<vmem>>) attributes {dimension_semantics = [], scalar_prefetch = 0 : i64, scratch_operands = 0 : i64, tpu.core_type = #tpu.core_type<tc>} {
    %c0 = arith.constant 0 : index
    %c0_0 = arith.constant 0 : index
    %0 = vector.load %arg0[%c0, %c0_0] : memref<1x64xf32, #tpu.memory_space<vmem>>, vector<1x64xf32>
    %c0_1 = arith.constant 0 : index
    %c0_2 = arith.constant 0 : index
    %1 = vector.load %arg1[%c0_1, %c0_2] : memref<64x128xf32, #tpu.memory_space<vmem>>, vector<64x128xf32>
    %cst = arith.constant dense<0.000000e+00> : vector<1x128xf32>
    %2 = tpu.matmul %0, %1, %cst {dimension_numbers = #tpu.dot_dimension_numbers<[1], [0], [0], [1], [0, 0, 1, 1], [], []>} : vector<1x64xf32>, vector<64x128xf32>, vector<1x128xf32> -> vector<1x128xf32>
    %c0_3 = arith.constant 0 : index
    %c0_4 = arith.constant 0 : index
    %3 = vector.load %arg3[%c0_3, %c0_4] : memref<1x128xf32, #tpu.memory_space<vmem>>, vector<1x128xf32>
    tpu.vector_store %arg3[%c0_3, %c0_4], %2 {strides = array<i32>} : memref<1x128xf32, #tpu.memory_space<vmem>>, vector<1x128xf32>,
    %c0_5 = arith.constant 0 : index
    %c0_6 = arith.constant 0 : index
    %4 = vector.load %arg0[%c0_5, %c0_6] : memref<1x64xf32, #tpu.memory_space<vmem>>, vector<1x64xf32>
    %c0_7 = arith.constant 0 : index
    %c0_8 = arith.constant 0 : index
    %5 = vector.load %arg2[%c0_7, %c0_8] : memref<64x128xf32, #tpu.memory_space<vmem>>, vector<64x128xf32>
    %cst_9 = arith.constant dense<0.000000e+00> : vector<1x128xf32>
    %6 = tpu.matmul %4, %5, %cst_9 {dimension_numbers = #tpu.dot_dimension_numbers<[1], [0], [0], [1], [0, 0, 1, 1], [], []>} : vector<1x64xf32>, vector<64x128xf32>, vector<1x128xf32> -> vector<1x128xf32>
    %7 = arith.cmpf one, %6, %2 : vector<1x128xf32>
    %8 = arith.extui %7 : vector<1x128xi1> to vector<1x128xi32>
    %cst_10 = arith.constant dense<0> : vector<1xi32>
    %9 = vector.multi_reduction <add>, %8, %cst_10 [1] : vector<1x128xi32> to vector<1xi32>
    %10 = vector.shape_cast %9 : vector<1xi32> to vector<1x1xi32>
    %c0_11 = arith.constant 0 : index
    %c0_12 = arith.constant 0 : index
    %11 = vector.load %arg4[%c0_11, %c0_12] : memref<1x1xi32, #tpu.memory_space<vmem>>, vector<1x1xi32>
    tpu.vector_store %arg4[%c0_11, %c0_12], %10 {strides = array<i32>} : memref<1x1xi32, #tpu.memory_space<vmem>>, vector<1x1xi32>,
    return
  }
}

</mosaic_0001>

<llo_original>
// kernel: _forward_impl.1
$region0: #{_forward_impl.1}
  #allocation0 [shape = 'u32[]', space=smem, size = 0x4, offset = 0x4, fixed_abs, tag = 'smem constant byte address 0x4 - core index']
  #allocation1 [shape = 'u32[72,128]{1,0:T(1,128)}', space=vmem, size = 0x9000, scoped, tag = 'internal scratch']
  %s0 = inlined_call_operand.hbm [shape: f32[1,64], index: 0, kind: input, shape index: {}]
  %s1 = inlined_call_operand.hbm [shape: f32[64,128], index: 1, kind: input, shape index: {}]
  %s2 = inlined_call_operand.hbm [shape: f32[64,128], index: 2, kind: input, shape index: {}]
  %s3 = inlined_call_operand.hbm [shape: f32[1,128], index: 3, kind: output, shape index: {0}]
  %s4 = inlined_call_operand.hbm [shape: s32[1,1], index: 4, kind: output, shape index: {1}]
  %5 = xla_tuple %s3, %s4
  %s6 = sld [smem:[#allocation0]]
  $region42: #{_forward_impl.1} parent=0
    _
  %s8 = ssub.s32 1, %s6
  %s9 = scalar_select 0, %s8, %s6
  $region1: #{_forward_impl.1} parent=0
    #allocation2 [shape = 'u8[512]{0}', space=vmem, size = 0x400, scoped, tag = 'input window, operand 0, single buffered']
    #allocation3 [shape = 's32[1]{0}', space=sflag, size = 0x4, scoped, tag = 'scoped memory for _forward_impl.1']
    #allocation4 [shape = 's32[1]{0}', space=sflag, size = 0x4, scoped, tag = 'scoped memory for _forward_impl.1']
    #allocation5 [shape = 'u8[32768]{0}', space=vmem, size = 0x8000, scoped, tag = 'input window, operand 1, single buffered']
    #allocation6 [shape = 's32[1]{0}', space=sflag, size = 0x4, scoped, tag = 'scoped memory for _forward_impl.1']
    #allocation7 [shape = 'u8[32768]{0}', space=vmem, size = 0x8000, scoped, tag = 'input window, operand 2, single buffered']
    #allocation8 [shape = 'u8[512]{0}', space=vmem, size = 0x400, scoped, tag = 'output window, operand 0, single buffered']
    #allocation9 [shape = 'u8[512]{0}', space=vmem, size = 0x400, scoped, tag = 'output window, operand 1, single buffered']
    #allocation10 [shape = 's32[1]{0}', space=sflag, size = 0x4, scoped, tag = 'scoped memory for _forward_impl.1']
    %10 = vsyncpa [#allocation3], 0
    %11 = vsyncpa [#allocation6], 0
    %12 = vsyncpa [#allocation4], 0
    %13 = vsyncpa [#allocation10], 0
    // Predicated region
    $region2: #{_forward_impl.1} parent=1 // pred_check
      _
    $region3: #{_forward_impl.1} parent=1 // pred_check_branch
      %15 = sbr.rel (0) target = $region5
    $region4: #{_forward_impl.1} parent=1 // pred_region
      %17 = vsyncadd [#allocation3], 0
      %s19 = sshll.u32 %s0, 4
      %s20 = int_to_ptr.hbm [resolvable:$true] %s19
      %s21 = sshll.u32 [#allocation2], 4
      %s22 = int_to_ptr.vmem [resolvable:$true] %s21
      %24 = dma.hbm_to_vmem [thread:$0]  %s20, 16, %s22, [#allocation3]
    $region5: #{_forward_impl.1} parent=1 // pred_fallthru
      _
    // Predicated region
    $region6: #{_forward_impl.1} parent=1 // pred_check
      _
    $region7: #{_forward_impl.1} parent=1 // pred_check_branch
      %26 = sbr.rel (0) target = $region9
    $region8: #{_forward_impl.1} parent=1 // pred_region
      %28 = vsyncadd [#allocation6], 0
      %s29 = sshll.u32 %s1, 4
      %s30 = int_to_ptr.hbm [resolvable:$true] %s29
      %s31 = sshll.u32 [#allocation5], 4
      %s32 = int_to_ptr.vmem [resolvable:$true] %s31
      %37 = dma.hbm_to_vmem [thread:$0]  %s30, 1024, %s32, [#allocation6], 128, 128, 8
    $region9: #{_forward_impl.1} parent=1 // pred_fallthru
      _
    // Predicated region
    $region10: #{_forward_impl.1} parent=1 // pred_check
      _
    $region11: #{_forward_impl.1} parent=1 // pred_check_branch
      %39 = sbr.rel (0) target = $region13
    $region12: #{_forward_impl.1} parent=1 // pred_region
      %41 = vsyncadd [#allocation6], 0
      %s42 = sshll.u32 %s2, 4
      %s43 = int_to_ptr.hbm [resolvable:$true] %s42
      %s44 = sshll.u32 [#allocation7], 4
      %s45 = int_to_ptr.vmem [resolvable:$true] %s44
      %50 = dma.hbm_to_vmem [thread:$0]  %s43, 1024, %s45, [#allocation6], 128, 128, 8
    $region13: #{_forward_impl.1} parent=1 // pred_fallthru
      _
    // Predicated region
    $region14: #{_forward_impl.1} parent=1 // pred_check
      _
    $region15: #{_forward_impl.1} parent=1 // pred_check_branch
      %52 = sbr.rel (0) target = $region17
    $region16: #{_forward_impl.1} parent=1 // pred_region
      %54 = dma.done [#allocation3], 16
    $region17: #{_forward_impl.1} parent=1 // pred_fallthru
      _
    // Predicated region
    $region18: #{_forward_impl.1} parent=1 // pred_check
      _
    $region19: #{_forward_impl.1} parent=1 // pred_check_branch
      %56 = sbr.rel (0) target = $region21
    $region20: #{_forward_impl.1} parent=1 // pred_region
      %58 = dma.done [#allocation6], 1024
    $region21: #{_forward_impl.1} parent=1 // pred_fallthru
      _
    // Predicated region
    $region22: #{_forward_impl.1} parent=1 // pred_check
      _
    $region23: #{_forward_impl.1} parent=1 // pred_check_branch
      %60 = sbr.rel (0) target = $region25
    $region24: #{_forward_impl.1} parent=1 // pred_region
      %62 = dma.done [#allocation6], 1024
    $region25: #{_forward_impl.1} parent=1 // pred_fallthru
      _
    %v63 = vld [vmem:[#allocation2] sm:$0x1]
    %v64 = vld [vmem:[#allocation5] sm:$0xff]
    %v65 = vld [vmem:[#allocation5 + $0x8] sm:$0xff]
    %v66 = vld [vmem:[#allocation5 + $0x10] sm:$0xff]
    %v67 = vld [vmem:[#allocation5 + $0x18] sm:$0xff]
    %v68 = vld [vmem:[#allocation5 + $0x20] sm:$0xff]
    %v69 = vld [vmem:[#allocation5 + $0x28] sm:$0xff]
    %v70 = vld [vmem:[#allocation5 + $0x30] sm:$0xff]
    %v71 = vld [vmem:[#allocation5 + $0x38] sm:$0xff]
    %vm72 = vcmask 523264
    %v74 = vsel %vm72, %v63, 0
    %76 = vmatpush.msra.mxu0 0.0
    %77 = vmatpush.msra.mxu0 0.0
    %78 = vmatpush.msra.mxu0 0.0
    %79 = vmatpush.msra.mxu0 0.0
    %80 = vmatpush.msra.mxu0 0.0
    %81 = vmatpush.msra.mxu0 0.0
    %82 = vmatpush.msra.mxu0 0.0
    %83 = vmatpush.msra.mxu0 0.0
    %84 = vmatpush.msra.mxu0 %v71
    %85 = vmatpush.msra.mxu0 %v70
    %86 = vmatpush.msra.mxu0 %v69
    %87 = vmatpush.msra.mxu0 %v68
    %88 = vmatpush.msra.mxu0 %v67
    %89 = vmatpush.msra.mxu0 %v66
    %90 = vmatpush.msra.mxu0 %v65
    %91 = vmatpush.msra.mxu0 %v64
    %92 = vmatmul.f32.gmra.mxu0 %v74
    %v93 = vpop.f32.mrf.mxu0
    %v94 = vadd.f32 0.0, %v93
    %95 = vdwg.mxu0
    %96 = vst [vmem:[#allocation8] sm:$0x1] %v94
    %v97 = vld [vmem:[#allocation2] sm:$0x1]
    %v98 = vld [vmem:[#allocation7] sm:$0xff]
    %v99 = vld [vmem:[#allocation7 + $0x8] sm:$0xff]
    %v100 = vld [vmem:[#allocation7 + $0x10] sm:$0xff]
    %v101 = vld [vmem:[#allocation7 + $0x18] sm:$0xff]
    %v102 = vld [vmem:[#allocation7 + $0x20] sm:$0xff]
    %v103 = vld [vmem:[#allocation7 + $0x28] sm:$0xff]
    %v104 = vld [vmem:[#allocation7 + $0x30] sm:$0xff]
    %v105 = vld [vmem:[#allocation7 + $0x38] sm:$0xff]
    %v107 = vsel %vm72, %v97, 0
    %109 = vmatpush.msra.mxu0 0.0
    %110 = vmatpush.msra.mxu0 0.0
    %111 = vmatpush.msra.mxu0 0.0
    %112 = vmatpush.msra.mxu0 0.0
    %113 = vmatpush.msra.mxu0 0.0
    %114 = vmatpush.msra.mxu0 0.0
    %115 = vmatpush.msra.mxu0 0.0
    %116 = vmatpush.msra.mxu0 0.0
    %117 = vmatpush.msra.mxu0 %v105
    %118 = vmatpush.msra.mxu0 %v104
    %119 = vmatpush.msra.mxu0 %v103
    %120 = vmatpush.msra.mxu0 %v102
    %121 = vmatpush.msra.mxu0 %v101
    %122 = vmatpush.msra.mxu0 %v100
    %123 = vmatpush.msra.mxu0 %v99
    %124 = vmatpush.msra.mxu0 %v98
    %125 = vmatmul.f32.gmra.mxu0 %v107
    %v126 = vpop.f32.mrf.mxu0
    %v127 = vadd.f32 0.0, %v126
    %128 = vdwg.mxu0
    %vm129 = vcmp.ne.f32.partialorder %v127, %v94
    %v130 = vsel %vm129, 1, 0
    %vm131 = vcmask 1040384
    %v132 = vsel %vm131, %v130, 0
    %v133 = vand.u32 %v132, 65535
    %v134 = vshrl.u32 %v132, 16
    %v135 = vcvt.s32.f32 %v133
    %v136 = vcvt.s32.f32 %v134
    %137 = vadd.xlane.f32.xlu0 %v135
    %v138 = vpop.xlane.xlu0 %137
    %139 = vadd.xlane.f32.xlu0 %v136
    %v140 = vpop.xlane.xlu0 %139
    %v141 = vcvt.f32.s32 %v138
    %v142 = vcvt.f32.s32 %v140
    %v143 = vshll.u32 %v142, 16
    %v144 = vadd.s32 %v143, %v141
    %vm145 = vcmask 0
    %146 = vst.msk [vmem:[#allocation9] sm:$0x1] %vm145, %v144
    // Predicated region
    $region26: #{_forward_impl.1} parent=1 // pred_check
      _
    $region27: #{_forward_impl.1} parent=1 // pred_check_branch
      %148 = sbr.rel (0) target = $region29
    $region28: #{_forward_impl.1} parent=1 // pred_region
      %150 = vsyncadd [#allocation4], 0
      %s152 = sshll.u32 [#allocation8], 4
      %s153 = int_to_ptr.vmem [resolvable:$true] %s152
      %s154 = sshll.u32 %s3, 4
      %s155 = int_to_ptr.hbm [resolvable:$true] %s154
      %157 = dma.vmem_to_hbm [thread:$0]  %s153, 16, %s155, [#allocation4]
    $region29: #{_forward_impl.1} parent=1 // pred_fallthru
      _
    // Predicated region
    $region30: #{_forward_impl.1} parent=1 // pred_check
      _
    $region31: #{_forward_impl.1} parent=1 // pred_check_branch
      %159 = sbr.rel (0) target = $region33
    $region32: #{_forward_impl.1} parent=1 // pred_region
      %161 = vsyncadd [#allocation10], 0
      %s163 = sshll.u32 [#allocation9], 4
      %s164 = int_to_ptr.vmem [resolvable:$true] %s163
      %s165 = sshll.u32 %s4, 4
      %s166 = int_to_ptr.hbm [resolvable:$true] %s165
      %168 = dma.vmem_to_hbm [thread:$0]  %s164, 16, %s166, [#allocation10]
    $region33: #{_forward_impl.1} parent=1 // pred_fallthru
      _
    // Predicated region
    $region34: #{_forward_impl.1} parent=1 // pred_check
      _
    $region35: #{_forward_impl.1} parent=1 // pred_check_branch
      %170 = sbr.rel (0) target = $region37
    $region36: #{_forward_impl.1} parent=1 // pred_region
      %172 = dma.done [#allocation4], 16
    $region37: #{_forward_impl.1} parent=1 // pred_fallthru
      _
    // Predicated region
    $region38: #{_forward_impl.1} parent=1 // pred_check
      _
    $region39: #{_forward_impl.1} parent=1 // pred_check_branch
      %174 = sbr.rel (0) target = $region41
    $region40: #{_forward_impl.1} parent=1 // pred_region
      %176 = dma.done [#allocation10], 16
    $region41: #{_forward_impl.1} parent=1 // pred_fallthru
      _
    %177 = vsyncpa [#allocation3], 1
    %178 = vsyncpa [#allocation6], 1
    %179 = vsyncpa [#allocation4], 1
    %180 = vsyncpa [#allocation10], 1

</llo_original>
